<compile_context>
chip_gen: v6e
topology: v6e:2x2x1
jax: 0.10.0
libtpu: 0.0.40
codegen_flags: <defaults>
</compile_context>

<pallas_src>
import functools

import jax
import jax.numpy as jnp
from jax.experimental import pallas as pl
from jax.experimental.pallas import tpu as pltpu


def _round_up(a, b):
    return ((a + b - 1) // b) * b


def _attention_gate_kernel(g_ref, x_ref, wg_ref, wx_ref, b_ref, wpsi_ref,
                           bpsi_ref, out_ref, *, use_mxu):
    """One channel-major pixel tile (batch dim squeezed by BlockSpec).

    g_ref    : (F_g,  TP)   gating-signal channels x pixels (pixels on lanes)
    x_ref    : (F_l,  TP)   skip-connection channels x pixels
    wg_ref   : (F_int, F_g) BN-folded W_g conv weight
    wx_ref   : (F_int, F_l) BN-folded W_x conv weight
    b_ref    : (F_int, 1)   combined BN-folded bias (bg + bx)
    wpsi_ref : (F_int, 1)   BN-folded psi conv weight (single output channel)
    bpsi_ref : (1, 1)       BN-folded psi bias
    out_ref  : (F_l,  TP)   gated output tile
    """
    g = g_ref[...]
    x = x_ref[...]
    f_int = wg_ref.shape[0]
    tp = g.shape[-1]

    if use_mxu:
        # Real U-Net channel widths: drive the MXU.
        acc = jnp.dot(wg_ref[...], g, preferred_element_type=jnp.float32)
        acc = acc + jnp.dot(wx_ref[...], x, preferred_element_type=jnp.float32)
        acc = acc + b_ref[...]
    else:
        # Tiny channel counts: unrolled VPU multiply-adds (per-channel outer
        # products) -- avoids MXU push/pop and padding waste for K=4-style dots.
        wg = wg_ref[...]
        wx = wx_ref[...]
        acc = jnp.broadcast_to(b_ref[...], (f_int, tp))
        for c in range(g.shape[0]):
            acc = acc + wg[:, c:c + 1] * g[c:c + 1, :]
        for c in range(x.shape[0]):
            acc = acc + wx[:, c:c + 1] * x[c:c + 1, :]

    r = jnp.maximum(acc, 0.0)                                      # ReLU, (F_int, TP)
    # psi conv has a single output channel: sublane reduce over F_int.
    psi_lin = jnp.sum(r * wpsi_ref[...], axis=0, keepdims=True) + bpsi_ref[...]
    psi = jax.nn.sigmoid(psi_lin)                                   # (1, TP)
    out_ref[...] = x * psi                                          # sublane broadcast gate


def _fold_bn(w, b, gamma, beta, mean, var, eps=1e-5):
    """Fold BatchNorm2d (eval) into a preceding 1x1 conv.

    w: (C_out, C_in), b: (C_out,).  Returns (w_eff, b_eff) with same shapes.
    """
    scale = gamma / jnp.sqrt(var + eps)
    w_eff = w * scale[:, None]
    b_eff = (b - mean) * scale + beta
    return w_eff, b_eff


@functools.partial(jax.jit, static_argnames=("tile_pixels",))
def attention_block(g, x, params, tile_pixels=2048):
    """Pallas implementation of Attention_Block.forward.

    g: (N, F_g, H, W) float32, x: (N, F_l, H, W) float32 (NCHW like PyTorch).
    Returns (N, F_l, H, W) float32.
    """
    N, F_g, H, W = g.shape
    _, F_l, _, _ = x.shape

    wg, bg = _fold_bn(params["wg"], params["bg"], params["bn_g_gamma"],
                      params["bn_g_beta"], params["bn_g_mean"], params["bn_g_var"])
    wx, bx = _fold_bn(params["wx"], params["bx"], params["bn_x_gamma"],
                      params["bn_x_beta"], params["bn_x_mean"], params["bn_x_var"])
    wpsi, bpsi = _fold_bn(params["wpsi"], params["bpsi"], params["bn_p_gamma"],
                          params["bn_p_beta"], params["bn_p_mean"], params["bn_p_var"])
    F_int = wg.shape[0]

    # Channel-major views: NCHW -> (N, C, P) is a free reshape (no HBM transpose).
    P = H * W
    g3 = g.reshape(N, F_g, P)
    x3 = x.reshape(N, F_l, P)

    # Pixel-tile selection: as big as a conservative cross-generation VMEM
    # budget allows (v7x has only 64 MiB physical), multiple of 128, and no
    # larger than the (128-rounded) pixel count.
    vmem_budget = 16 * 1024 * 1024
    bytes_per_pixel = 4 * 2 * (F_g + 2 * F_l) + 4 * (F_int + 1)
    tp = min(int(tile_pixels), max(128, vmem_budget // max(1, bytes_per_pixel)))
    tp = max(128, (tp // 128) * 128)
    tp = min(tp, _round_up(P, 128))

    # Pad the pixel axis instead of asserting divisibility.
    P_pad = _round_up(P, tp)
    if P_pad != P:
        pad = P_pad - P
        g3 = jnp.pad(g3, ((0, 0), (0, 0), (0, pad)))
        x3 = jnp.pad(x3, ((0, 0), (0, 0), (0, pad)))
    num_tiles = P_pad // tp

    # Kernel-side parameter layouts (channels on sublanes).
    wg_k = wg                              # (F_int, F_g)
    wx_k = wx                              # (F_int, F_l)
    bias_k = (bg + bx).reshape(F_int, 1)   # combined bias
    wpsi_k = wpsi.reshape(F_int, 1)
    bpsi_k = bpsi.reshape(1, 1)

    # Degenerate channel counts -> pure VPU path; real widths -> MXU path.
    use_mxu = max(F_g, F_l, F_int) >= 32
    kernel = functools.partial(_attention_gate_kernel, use_mxu=use_mxu)

    grid = (N, num_tiles)
    pix_spec = lambda c: pl.BlockSpec((None, c, tp), lambda n, p: (n, 0, p))
    full_spec = lambda shp: pl.BlockSpec(shp, lambda n, p: (0, 0))

    pixels = N * P
    cost = pl.CostEstimate(
        flops=int(2 * pixels * F_int * (F_g + F_l + 1) + 6 * pixels * F_int
                  + 2 * pixels * F_l),
        transcendentals=int(pixels),
        bytes_accessed=int(4 * pixels * (F_g + 2 * F_l)),
    )

    out3 = pl.pallas_call(
        kernel,
        out_shape=jax.ShapeDtypeStruct((N, F_l, P_pad), jnp.float32),
        grid_spec=pltpu.PrefetchScalarGridSpec(
            num_scalar_prefetch=0,
            grid=grid,
            in_specs=[
                pix_spec(F_g),                 # g pixels   (F_g, TP)
                pix_spec(F_l),                 # x pixels   (F_l, TP)
                full_spec((F_int, F_g)),       # wg
                full_spec((F_int, F_l)),       # wx
                full_spec((F_int, 1)),         # combined bias
                full_spec((F_int, 1)),         # wpsi
                full_spec((1, 1)),             # bpsi
            ],
            out_specs=pl.BlockSpec((None, F_l, tp), lambda n, p: (n, 0, p)),
        ),
        compiler_params=pltpu.CompilerParams(
            dimension_semantics=("parallel", "parallel"),
            vmem_limit_bytes=32 * 1024 * 1024,
        ),
        cost_estimate=cost,
    )(g3, x3, wg_k, wx_k, bias_k, wpsi_k, bpsi_k)

    # (N, F_l, P_pad) -> NCHW (drop pixel padding; reshape is free).
    return out3[:, :, :P].reshape(N, F_l, H, W)


def make_params(key, F_g, F_l, F_int):
    """Deterministic synthetic parameters matching the PyTorch module's shapes."""
    ks = jax.random.split(key, 6)
    f32 = jnp.float32
    return {
        # Conv2d(F_g, F_int, 1): weight (F_int, F_g), bias (F_int,)
        "wg": jax.random.normal(ks[0], (F_int, F_g), f32) * 0.1,
        "bg": jax.random.normal(ks[1], (F_int,), f32) * 0.1,
        # Conv2d(F_l, F_int, 1)
        "wx": jax.random.normal(ks[2], (F_int, F_l), f32) * 0.1,
        "bx": jax.random.normal(ks[3], (F_int,), f32) * 0.1,
        # Conv2d(F_int, 1, 1)
        "wpsi": jax.random.normal(ks[4], (1, F_int), f32) * 0.1,
        "bpsi": jax.random.normal(ks[5], (1,), f32) * 0.1,
        # BatchNorm2d default init / running stats (eval mode)
        "bn_g_gamma": jnp.ones((F_int,), f32), "bn_g_beta": jnp.zeros((F_int,), f32),
        "bn_g_mean": jnp.zeros((F_int,), f32), "bn_g_var": jnp.ones((F_int,), f32),
        "bn_x_gamma": jnp.ones((F_int,), f32), "bn_x_beta": jnp.zeros((F_int,), f32),
        "bn_x_mean": jnp.zeros((F_int,), f32), "bn_x_var": jnp.ones((F_int,), f32),
        "bn_p_gamma": jnp.ones((1,), f32), "bn_p_beta": jnp.zeros((1,), f32),
        "bn_p_mean": jnp.zeros((1,), f32), "bn_p_var": jnp.ones((1,), f32),
    }


def reference_attention_block(g, x, params):
    """Pure-JAX reference mirroring the PyTorch forward (eval-mode BN)."""
    wg, bg = _fold_bn(params["wg"], params["bg"], params["bn_g_gamma"],
                      params["bn_g_beta"], params["bn_g_mean"], params["bn_g_var"])
    wx, bx = _fold_bn(params["wx"], params["bx"], params["bn_x_gamma"],
                      params["bn_x_beta"], params["bn_x_mean"], params["bn_x_var"])
    wpsi, bpsi = _fold_bn(params["wpsi"], params["bpsi"], params["bn_p_gamma"],
                          params["bn_p_beta"], params["bn_p_mean"], params["bn_p_var"])
    g1 = jnp.einsum("nchw,oc->nohw", g, wg) + bg[None, :, None, None]
    x1 = jnp.einsum("nchw,oc->nohw", x, wx) + bx[None, :, None, None]
    r = jax.nn.relu(g1 + x1)
    psi = jax.nn.sigmoid(jnp.einsum("nchw,oc->nohw", r, wpsi)
                         + bpsi[None, :, None, None])
    return x * psi


if __name__ == "__main__":
    # Small shapes: batch=2, F_g=F_l=4, F_int=8, spatial=16x16.
    N, F_g, F_l, F_int, H, W = 2, 4, 4, 8, 16, 16

    key = jax.random.PRNGKey(0)
    kg, kx, kp = jax.random.split(key, 3)
    g = jax.random.normal(kg, (N, F_g, H, W), jnp.float32)
    x = jax.random.normal(kx, (N, F_l, H, W), jnp.float32)
    params = make_params(kp, F_g, F_l, F_int)

    out = attention_block(g, x, params)
    out = jax.block_until_ready(out)

    ref = reference_attention_block(g, x, params)
    assert out.shape == (N, F_l, H, W)
    assert jnp.allclose(out, ref, atol=1e-5, rtol=1e-5), \
        float(jnp.max(jnp.abs(out - ref)))

    print("KERNEL_OK")
</pallas_src>

<mosaic_0001>
module attributes {stable_mosaic.version = 11 : i64} {
  func.func @_attention_gate_kernel(%arg0: i32, %arg1: i32, %arg2: memref<1x4x256xf32, #tpu.memory_space<vmem>>, %arg3: memref<1x4x256xf32, #tpu.memory_space<vmem>>, %arg4: memref<8x4xf32, #tpu.memory_space<vmem>>, %arg5: memref<8x4xf32, #tpu.memory_space<vmem>>, %arg6: memref<8x1xf32, #tpu.memory_space<vmem>>, %arg7: memref<8x1xf32, #tpu.memory_space<vmem>>, %arg8: memref<1x1xf32, #tpu.memory_space<vmem>>, %arg9: memref<1x4x256xf32, #tpu.memory_space<vmem>>) attributes {dimension_semantics = [#tpu.dimension_semantics<parallel>, #tpu.dimension_semantics<parallel>], iteration_bounds = array<i64: 2, 1>, scalar_prefetch = 0 : i64, scratch_operands = 0 : i64, tpu.core_type = #tpu.core_type<tc>, window_params = [{transform_indices = @transform_0, window_bounds = array<i64: 1, 4, 256>}, {transform_indices = @transform_1, window_bounds = array<i64: 1, 4, 256>}, {pipeline_mode = #tpu.pipeline_mode<synchronous>, transform_indices = @transform_2, window_bounds = array<i64: 8, 4>}, {pipeline_mode = #tpu.pipeline_mode<synchronous>, transform_indices = @transform_3, window_bounds = array<i64: 8, 4>}, {pipeline_mode = #tpu.pipeline_mode<synchronous>, transform_indices = @transform_4, window_bounds = array<i64: 8, 1>}, {pipeline_mode = #tpu.pipeline_mode<synchronous>, transform_indices = @transform_5, window_bounds = array<i64: 8, 1>}, {pipeline_mode = #tpu.pipeline_mode<synchronous>, transform_indices = @transform_6, window_bounds = array<i64: 1, 1>}, {transform_indices = @transform_7, window_bounds = array<i64: 1, 4, 256>}]} {
    %c0 = arith.constant 0 : index
    %c0_0 = arith.constant 0 : index
    %c0_1 = arith.constant 0 : index
    %0 = vector.load %arg2[%c0, %c0_0, %c0_1] : memref<1x4x256xf32, #tpu.memory_space<vmem>>, vector<1x4x256xf32>
    %1 = vector.shape_cast %0 : vector<1x4x256xf32> to vector<4x256xf32>
    %c0_2 = arith.constant 0 : index
    %c0_3 = arith.constant 0 : index
    %c0_4 = arith.constant 0 : index
    %2 = vector.load %arg3[%c0_2, %c0_3, %c0_4] : memref<1x4x256xf32, #tpu.memory_space<vmem>>, vector<1x4x256xf32>
    %3 = vector.shape_cast %2 : vector<1x4x256xf32> to vector<4x256xf32>
    %c0_5 = arith.constant 0 : index
    %c0_6 = arith.constant 0 : index
    %4 = vector.load %arg4[%c0_5, %c0_6] : memref<8x4xf32, #tpu.memory_space<vmem>>, vector<8x4xf32>
    %c0_7 = arith.constant 0 : index
    %c0_8 = arith.constant 0 : index
    %5 = vector.load %arg5[%c0_7, %c0_8] : memref<8x4xf32, #tpu.memory_space<vmem>>, vector<8x4xf32>
    %c0_9 = arith.constant 0 : index
    %c0_10 = arith.constant 0 : index
    %6 = vector.load %arg6[%c0_9, %c0_10] : memref<8x1xf32, #tpu.memory_space<vmem>>, vector<8x1xf32>
    %7 = vector.shape_cast %6 : vector<8x1xf32> to vector<8x1xf32>
    %8 = vector.broadcast %7 : vector<8x1xf32> to vector<8x256xf32>
    %9 = vector.extract_strided_slice %4 {offsets = [0, 0], sizes = [8, 1], strides = [1, 1]} : vector<8x4xf32> to vector<8x1xf32>
    %10 = vector.extract_strided_slice %1 {offsets = [0, 0], sizes = [1, 256], strides = [1, 1]} : vector<4x256xf32> to vector<1x256xf32>
    %11 = vector.broadcast %9 : vector<8x1xf32> to vector<8x256xf32>
    %12 = vector.broadcast %10 : vector<1x256xf32> to vector<8x256xf32>
    %13 = arith.mulf %11, %12 : vector<8x256xf32>
    %14 = arith.addf %8, %13 : vector<8x256xf32>
    %15 = vector.extract_strided_slice %4 {offsets = [0, 1], sizes = [8, 1], strides = [1, 1]} : vector<8x4xf32> to vector<8x1xf32>
    %16 = vector.extract_strided_slice %1 {offsets = [1, 0], sizes = [1, 256], strides = [1, 1]} : vector<4x256xf32> to vector<1x256xf32>
    %17 = vector.broadcast %15 : vector<8x1xf32> to vector<8x256xf32>
    %18 = vector.broadcast %16 : vector<1x256xf32> to vector<8x256xf32>
    %19 = arith.mulf %17, %18 : vector<8x256xf32>
    %20 = arith.addf %14, %19 : vector<8x256xf32>
    %21 = vector.extract_strided_slice %4 {offsets = [0, 2], sizes = [8, 1], strides = [1, 1]} : vector<8x4xf32> to vector<8x1xf32>
    %22 = vector.extract_strided_slice %1 {offsets = [2, 0], sizes = [1, 256], strides = [1, 1]} : vector<4x256xf32> to vector<1x256xf32>
    %23 = vector.broadcast %21 : vector<8x1xf32> to vector<8x256xf32>
    %24 = vector.broadcast %22 : vector<1x256xf32> to vector<8x256xf32>
    %25 = arith.mulf %23, %24 : vector<8x256xf32>
    %26 = arith.addf %20, %25 : vector<8x256xf32>
    %27 = vector.extract_strided_slice %4 {offsets = [0, 3], sizes = [8, 1], strides = [1, 1]} : vector<8x4xf32> to vector<8x1xf32>
    %28 = vector.extract_strided_slice %1 {offsets = [3, 0], sizes = [1, 256], strides = [1, 1]} : vector<4x256xf32> to vector<1x256xf32>
    %29 = vector.broadcast %27 : vector<8x1xf32> to vector<8x256xf32>
    %30 = vector.broadcast %28 : vector<1x256xf32> to vector<8x256xf32>
    %31 = arith.mulf %29, %30 : vector<8x256xf32>
    %32 = arith.addf %26, %31 : vector<8x256xf32>
    %33 = vector.extract_strided_slice %5 {offsets = [0, 0], sizes = [8, 1], strides = [1, 1]} : vector<8x4xf32> to vector<8x1xf32>
    %34 = vector.extract_strided_slice %3 {offsets = [0, 0], sizes = [1, 256], strides = [1, 1]} : vector<4x256xf32> to vector<1x256xf32>
    %35 = vector.broadcast %33 : vector<8x1xf32> to vector<8x256xf32>
    %36 = vector.broadcast %34 : vector<1x256xf32> to vector<8x256xf32>
    %37 = arith.mulf %35, %36 : vector<8x256xf32>
    %38 = arith.addf %32, %37 : vector<8x256xf32>
    %39 = vector.extract_strided_slice %5 {offsets = [0, 1], sizes = [8, 1], strides = [1, 1]} : vector<8x4xf32> to vector<8x1xf32>
    %40 = vector.extract_strided_slice %3 {offsets = [1, 0], sizes = [1, 256], strides = [1, 1]} : vector<4x256xf32> to vector<1x256xf32>
    %41 = vector.broadcast %39 : vector<8x1xf32> to vector<8x256xf32>
    %42 = vector.broadcast %40 : vector<1x256xf32> to vector<8x256xf32>
    %43 = arith.mulf %41, %42 : vector<8x256xf32>
    %44 = arith.addf %38, %43 : vector<8x256xf32>
    %45 = vector.extract_strided_slice %5 {offsets = [0, 2], sizes = [8, 1], strides = [1, 1]} : vector<8x4xf32> to vector<8x1xf32>
    %46 = vector.extract_strided_slice %3 {offsets = [2, 0], sizes = [1, 256], strides = [1, 1]} : vector<4x256xf32> to vector<1x256xf32>
    %47 = vector.broadcast %45 : vector<8x1xf32> to vector<8x256xf32>
    %48 = vector.broadcast %46 : vector<1x256xf32> to vector<8x256xf32>
    %49 = arith.mulf %47, %48 : vector<8x256xf32>
    %50 = arith.addf %44, %49 : vector<8x256xf32>
    %51 = vector.extract_strided_slice %5 {offsets = [0, 3], sizes = [8, 1], strides = [1, 1]} : vector<8x4xf32> to vector<8x1xf32>
    %52 = vector.extract_strided_slice %3 {offsets = [3, 0], sizes = [1, 256], strides = [1, 1]} : vector<4x256xf32> to vector<1x256xf32>
    %53 = vector.broadcast %51 : vector<8x1xf32> to vector<8x256xf32>
    %54 = vector.broadcast %52 : vector<1x256xf32> to vector<8x256xf32>
    %55 = arith.mulf %53, %54 : vector<8x256xf32>
    %56 = arith.addf %50, %55 : vector<8x256xf32>
    %cst = arith.constant 0.000000e+00 : f32
    %57 = vector.broadcast %cst : f32 to vector<8x256xf32>
    %58 = arith.maximumf %56, %57 : vector<8x256xf32>
    %c0_11 = arith.constant 0 : index
    %c0_12 = arith.constant 0 : index
    %59 = vector.load %arg7[%c0_11, %c0_12] : memref<8x1xf32, #tpu.memory_space<vmem>>, vector<8x1xf32>
    %60 = vector.broadcast %59 : vector<8x1xf32> to vector<8x256xf32>
    %61 = arith.mulf %58, %60 : vector<8x256xf32>
    %cst_13 = arith.constant dense<0.000000e+00> : vector<256xf32>
    %62 = vector.multi_reduction <add>, %61, %cst_13 [0] : vector<8x256xf32> to vector<256xf32>
    %63 = vector.shape_cast %62 : vector<256xf32> to vector<1x256xf32>
    %c0_14 = arith.constant 0 : index
    %c0_15 = arith.constant 0 : index
    %64 = vector.load %arg8[%c0_14, %c0_15] : memref<1x1xf32, #tpu.memory_space<vmem>>, vector<1x1xf32>
    %65 = vector.broadcast %64 : vector<1x1xf32> to vector<1x256xf32>
    %66 = arith.addf %63, %65 : vector<1x256xf32>
    %67 = arith.negf %66 : vector<1x256xf32>
    %68 = math.exp %67 : vector<1x256xf32>
    %cst_16 = arith.constant 1.000000e+00 : f32
    %69 = vector.broadcast %cst_16 : f32 to vector<1x256xf32>
    %70 = arith.addf %69, %68 : vector<1x256xf32>
    %71 = arith.divf %69, %70 : vector<1x256xf32>
    %72 = vector.broadcast %71 : vector<1x256xf32> to vector<4x256xf32>
    %73 = arith.mulf %3, %72 : vector<4x256xf32>
    %c0_17 = arith.constant 0 : index
    %c0_18 = arith.constant 0 : index
    %c0_19 = arith.constant 0 : index
    %74 = vector.load %arg9[%c0_17, %c0_18, %c0_19] : memref<1x4x256xf32, #tpu.memory_space<vmem>>, vector<1x4x256xf32>
    %75 = vector.shape_cast %74 : vector<1x4x256xf32> to vector<4x256xf32>
    %76 = vector.shape_cast %73 : vector<4x256xf32> to vector<1x4x256xf32>
    tpu.vector_store %arg9[%c0_17, %c0_18, %c0_19], %76 {strides = array<i32>} : memref<1x4x256xf32, #tpu.memory_space<vmem>>, vector<1x4x256xf32>,
    return
  }
  func.func @transform_0(%arg0: i32, %arg1: i32) -> (i32, i32, i32) {
    %c0_i32 = arith.constant 0 : i32
    %c0_i32_0 = arith.constant 0 : i32
    return %arg0, %c0_i32, %arg1 : i32, i32, i32
  }
  func.func @transform_1(%arg0: i32, %arg1: i32) -> (i32, i32, i32) {
    %c0_i32 = arith.constant 0 : i32
    %c0_i32_0 = arith.constant 0 : i32
    return %arg0, %c0_i32, %arg1 : i32, i32, i32
  }
  func.func @transform_2(%arg0: i32, %arg1: i32) -> (i32, i32) {
    %c0_i32 = arith.constant 0 : i32
    %c0_i32_0 = arith.constant 0 : i32
    %c0_i32_1 = arith.constant 0 : i32
    return %c0_i32, %c0_i32_0 : i32, i32
  }
  func.func @transform_3(%arg0: i32, %arg1: i32) -> (i32, i32) {
    %c0_i32 = arith.constant 0 : i32
    %c0_i32_0 = arith.constant 0 : i32
    %c0_i32_1 = arith.constant 0 : i32
    return %c0_i32, %c0_i32_0 : i32, i32
  }
  func.func @transform_4(%arg0: i32, %arg1: i32) -> (i32, i32) {
    %c0_i32 = arith.constant 0 : i32
    %c0_i32_0 = arith.constant 0 : i32
    %c0_i32_1 = arith.constant 0 : i32
    return %c0_i32, %c0_i32_0 : i32, i32
  }
  func.func @transform_5(%arg0: i32, %arg1: i32) -> (i32, i32) {
    %c0_i32 = arith.constant 0 : i32
    %c0_i32_0 = arith.constant 0 : i32
    %c0_i32_1 = arith.constant 0 : i32
    return %c0_i32, %c0_i32_0 : i32, i32
  }
  func.func @transform_6(%arg0: i32, %arg1: i32) -> (i32, i32) {
    %c0_i32 = arith.constant 0 : i32
    %c0_i32_0 = arith.constant 0 : i32
    %c0_i32_1 = arith.constant 0 : i32
    return %c0_i32, %c0_i32_0 : i32, i32
  }
  func.func @transform_7(%arg0: i32, %arg1: i32) -> (i32, i32, i32) {
    %c0_i32 = arith.constant 0 : i32
    %c0_i32_0 = arith.constant 0 : i32
    return %arg0, %c0_i32, %arg1 : i32, i32, i32
  }
}

</mosaic_0001>

<llo_original>
// kernel: attention_block.1
$region0: #{attention_block.1}
  #allocation0 [shape = 'u32[]', space=smem, size = 0x4, offset = 0x4, fixed_abs, tag = 'smem constant byte address 0x4 - core index']
  #allocation1 [shape = 'u32[144,128]{1,0:T(1,128)}', space=vmem, size = 0x12000, scoped, tag = 'internal scratch']
  #allocation2 [shape = 'f32[1,1]{1,0:T(1,128)S(1)}', space=vmem, size = 0x200, scoped, tag = 'scoped memory for attention_block.1']
  %s0 = inlined_call_operand.vmem [shape: f32[2,4,256], index: 0, kind: input, shape index: {}]
  %s1 = inlined_call_operand.vmem [shape: f32[2,4,256], index: 1, kind: input, shape index: {}]
  %s2 = inlined_call_operand.vmem [shape: f32[8,4], index: 2, kind: input, shape index: {}]
  %s3 = inlined_call_operand.vmem [shape: f32[8,4], index: 3, kind: input, shape index: {}]
  %s4 = inlined_call_operand.vmem [shape: f32[8,1], index: 4, kind: input, shape index: {}]
  %s5 = inlined_call_operand.vmem [shape: f32[8,1], index: 5, kind: input, shape index: {}]
  %s6 = inlined_call_operand.<no memory space> [shape: f32[1,1], index: 6, kind: input, shape index: {}]
  %s7 = inlined_call_operand.vmem [shape: f32[2,4,256], index: 7, kind: output, shape index: {}]
  %s8 = sld [smem:[#allocation0]]
  $region61: #{attention_block.1} parent=0
    _
  %s10 = ssub.s32 1, %s8
  %s11 = scalar_select 0, %s10, %s8
  %v12 = vstv %s6
  %13 = vst [vmem:[#allocation2] sm:$0x1] %v12
  loop: start=0, step=1, limit=4
  $region2: #{attention_block.1} parent=0 // loop_pre_header
    _
  $region3: #{attention_block.1} parent=0 // loop_header
    %s15 = sphi 0, %s19
    %p16 = scmp.ge.s32.totalorder %s15, 4
    %s22 = sphi 0, %s34
    %s23 = sphi 0, %s30
    %s24 = sphi 0, %s22
    %s25 = sphi 0, %s23
    %s26 = sphi 0, %s24
    %s27 = sphi 0, %s25
    %s39 = sphi 0, %s41
    %s42 = sphi 0, %s39
    %s43 = sphi 0, %s42
    %s59 = sphi 0, %s43
    %s67 = sphi 0, %s69
    %s70 = sphi 0, %s67
    %s71 = sphi 0, %s70
    %s87 = sphi 0, %s71
    %s91 = sphi 0, %s91
    %s93 = sphi 0, %s91
    %s94 = sphi 0, %s93
    %s108 = sphi 0, %s94
    %s112 = sphi 0, %s112
    %s114 = sphi 0, %s112
    %s115 = sphi 0, %s114
    %s129 = sphi 0, %s115
    %s133 = sphi 0, %s133
    %s135 = sphi 0, %s133
    %s136 = sphi 0, %s135
    %s150 = sphi 0, %s136
    %s154 = sphi 0, %s154
    %s156 = sphi 0, %s154
    %s157 = sphi 0, %s156
    %s171 = sphi 0, %s157
    %s175 = sphi 0, %s175
    %s177 = sphi 0, %s175
    %s178 = sphi 0, %s177
    %s192 = sphi 0, %s178
    %s200 = sphi 0, %s202
    %s203 = sphi 0, %s200
    %s204 = sphi 0, %s203
    %s220 = sphi 0, %s204
  $region4: #{attention_block.1} parent=0 // loop_header_branch
    %18 = sbr.rel (%p16) target = $region8
  $region5: #{attention_block.1} parent=0 // loop_body
    %s20 = ssub.s32 %s15, 1
    %s21 = ssub.s32 %s15, 2
    %s28 = sadd.s32 1, %s23
    %p29 = scmp.ge.s32.totalorder %s28, 1
    %s30 = scalar_select %p29, 0, %s28
    %s31 = sadd.s32 1, %s22
    %s32 = scalar_select %p29, %s31, %s22
    %p33 = scmp.ge.s32.totalorder %s32, 2
    %s34 = scalar_select %p33, 0, %s32
    %s35 = ssub.s32 %s22, %s34
    %s36 = ssub.s32 %s23, %s30
    %s37 = sor.u32 %s35, %s36
    %p38 = scmp.eq.s32.totalorder %s37, 0
    %s40 = sadd.s32 %s39, 1
    %s41 = scalar_select %p38, %s39, %s40
    %p44 = pneg %p38
    %p45 = scmp.eq.s32.totalorder %s15, 1
    %p46 = por %p44, %p45
    %p47 = scmp.ne.s32.totalorder %s39, %s42
    %p48 = scmp.eq.s32.totalorder %s15, 0
    %p49 = por %p47, %p48
    %p50 = scmp.ne.s32.totalorder %s39, %s42
    %p51 = scmp.eq.s32.totalorder %s20, 1
    %p52 = por %p50, %p51
    %p53 = scmp.ne.s32.totalorder %s42, %s43
    %p54 = scmp.eq.s32.totalorder %s20, 0
    %p55 = por %p53, %p54
    %p56 = scmp.ne.s32.totalorder %s42, %s43
    %p57 = scmp.eq.s32.totalorder %s21, 1
    %p58 = por %p56, %p57
    %p60 = scmp.ne.s32.totalorder %s43, %s59
    %p61 = scmp.eq.s32.totalorder %s21, 0
    %p62 = por %p60, %p61
    %s63 = ssub.s32 %s22, %s34
    %s64 = ssub.s32 %s23, %s30
    %s65 = sor.u32 %s63, %s64
    %p66 = scmp.eq.s32.totalorder %s65, 0
    %s68 = sadd.s32 %s67, 1
    %s69 = scalar_select %p66, %s67, %s68
    %p72 = pneg %p66
    %p73 = scmp.eq.s32.totalorder %s15, 1
    %p74 = por %p72, %p73
    %p75 = scmp.ne.s32.totalorder %s67, %s70
    %p76 = scmp.eq.s32.totalorder %s15, 0
    %p77 = por %p75, %p76
    %p78 = scmp.ne.s32.totalorder %s67, %s70
    %p79 = scmp.eq.s32.totalorder %s20, 1
    %p80 = por %p78, %p79
    %p81 = scmp.ne.s32.totalorder %s70, %s71
    %p82 = scmp.eq.s32.totalorder %s20, 0
    %p83 = por %p81, %p82
    %p84 = scmp.ne.s32.totalorder %s70, %s71
    %p85 = scmp.eq.s32.totalorder %s21, 1
    %p86 = por %p84, %p85
    %p88 = scmp.ne.s32.totalorder %s71, %s87
    %p89 = scmp.eq.s32.totalorder %s21, 0
    %p90 = por %p88, %p89
    %s92 = sadd.s32 %s91, 1
    %p95 = scmp.eq.s32.totalorder %s15, 1
    %p96 = scmp.ne.s32.totalorder %s91, %s93
    %p97 = scmp.eq.s32.totalorder %s15, 0
    %p98 = por %p96, %p97
    %p99 = scmp.ne.s32.totalorder %s91, %s93
    %p100 = scmp.eq.s32.totalorder %s20, 1
    %p101 = por %p99, %p100
    %p102 = scmp.ne.s32.totalorder %s93, %s94
    %p103 = scmp.eq.s32.totalorder %s20, 0
    %p104 = por %p102, %p103
    %p105 = scmp.ne.s32.totalorder %s93, %s94
    %p106 = scmp.eq.s32.totalorder %s21, 1
    %p107 = por %p105, %p106
    %p109 = scmp.ne.s32.totalorder %s94, %s108
    %p110 = scmp.eq.s32.totalorder %s21, 0
    %p111 = por %p109, %p110
    %s113 = sadd.s32 %s112, 1
    %p116 = scmp.eq.s32.totalorder %s15, 1
    %p117 = scmp.ne.s32.totalorder %s112, %s114
    %p118 = scmp.eq.s32.totalorder %s15, 0
    %p119 = por %p117, %p118
    %p120 = scmp.ne.s32.totalorder %s112, %s114
    %p121 = scmp.eq.s32.totalorder %s20, 1
    %p122 = por %p120, %p121
    %p123 = scmp.ne.s32.totalorder %s114, %s115
    %p124 = scmp.eq.s32.totalorder %s20, 0
    %p125 = por %p123, %p124
    %p126 = scmp.ne.s32.totalorder %s114, %s115
    %p127 = scmp.eq.s32.totalorder %s21, 1
    %p128 = por %p126, %p127
    %p130 = scmp.ne.s32.totalorder %s115, %s129
    %p131 = scmp.eq.s32.totalorder %s21, 0
    %p132 = por %p130, %p131
    %s134 = sadd.s32 %s133, 1
    %p137 = scmp.eq.s32.totalorder %s15, 1
    %p138 = scmp.ne.s32.totalorder %s133, %s135
    %p139 = scmp.eq.s32.totalorder %s15, 0
    %p140 = por %p138, %p139
    %p141 = scmp.ne.s32.totalorder %s133, %s135
    %p142 = scmp.eq.s32.totalorder %s20, 1
    %p143 = por %p141, %p142
    %p144 = scmp.ne.s32.totalorder %s135, %s136
    %p145 = scmp.eq.s32.totalorder %s20, 0
    %p146 = por %p144, %p145
    %p147 = scmp.ne.s32.totalorder %s135, %s136
    %p148 = scmp.eq.s32.totalorder %s21, 1
    %p149 = por %p147, %p148
    %p151 = scmp.ne.s32.totalorder %s136, %s150
    %p152 = scmp.eq.s32.totalorder %s21, 0
    %p153 = por %p151, %p152
    %s155 = sadd.s32 %s154, 1
    %p158 = scmp.eq.s32.totalorder %s15, 1
    %p159 = scmp.ne.s32.totalorder %s154, %s156
    %p160 = scmp.eq.s32.totalorder %s15, 0
    %p161 = por %p159, %p160
    %p162 = scmp.ne.s32.totalorder %s154, %s156
    %p163 = scmp.eq.s32.totalorder %s20, 1
    %p164 = por %p162, %p163
    %p165 = scmp.ne.s32.totalorder %s156, %s157
    %p166 = scmp.eq.s32.totalorder %s20, 0
    %p167 = por %p165, %p166
    %p168 = scmp.ne.s32.totalorder %s156, %s157
    %p169 = scmp.eq.s32.totalorder %s21, 1
    %p170 = por %p168, %p169
    %p172 = scmp.ne.s32.totalorder %s157, %s171
    %p173 = scmp.eq.s32.totalorder %s21, 0
    %p174 = por %p172, %p173
    %s176 = sadd.s32 %s175, 1
    %p179 = scmp.eq.s32.totalorder %s15, 1
    %p180 = scmp.ne.s32.totalorder %s175, %s177
    %p181 = scmp.eq.s32.totalorder %s15, 0
    %p182 = por %p180, %p181
    %p183 = scmp.ne.s32.totalorder %s175, %s177
    %p184 = scmp.eq.s32.totalorder %s20, 1
    %p185 = por %p183, %p184
    %p186 = scmp.ne.s32.totalorder %s177, %s178
    %p187 = scmp.eq.s32.totalorder %s20, 0
    %p188 = por %p186, %p187
    %p189 = scmp.ne.s32.totalorder %s177, %s178
    %p190 = scmp.eq.s32.totalorder %s21, 1
    %p191 = por %p189, %p190
    %p193 = scmp.ne.s32.totalorder %s178, %s192
    %p194 = scmp.eq.s32.totalorder %s21, 0
    %p195 = por %p193, %p194
    %s196 = ssub.s32 %s22, %s34
    %s197 = ssub.s32 %s23, %s30
    %s198 = sor.u32 %s196, %s197
    %p199 = scmp.eq.s32.totalorder %s198, 0
    %s201 = sadd.s32 %s200, 1
    %s202 = scalar_select %p199, %s200, %s201
    %p205 = pneg %p199
    %p206 = scmp.eq.s32.totalorder %s15, 1
    %p207 = por %p205, %p206
    %p208 = scmp.ne.s32.totalorder %s200, %s203
    %p209 = scmp.eq.s32.totalorder %s15, 0
    %p210 = por %p208, %p209
    %p211 = scmp.ne.s32.totalorder %s200, %s203
    %p212 = scmp.eq.s32.totalorder %s20, 1
    %p213 = por %p211, %p212
    %p214 = scmp.ne.s32.totalorder %s203, %s204
    %p215 = scmp.eq.s32.totalorder %s20, 0
    %p216 = por %p214, %p215
    %p217 = scmp.ne.s32.totalorder %s203, %s204
    %p218 = scmp.eq.s32.totalorder %s21, 1
    %p219 = por %p217, %p218
    %p221 = scmp.ne.s32.totalorder %s204, %s220
    %p222 = scmp.eq.s32.totalorder %s21, 0
    %p223 = por %p221, %p222
    %p224 = scmp.le.s32.totalorder 1, %s15
    %p225 = scmp.lt.s32.totalorder %s15, 3
    %p226 = pnand %p224, %p225
    %p227 = pneg %p226
    // Predicated region
    $region9: #{attention_block.1} parent=5 // pred_check
      _
    $region10: #{attention_block.1} parent=5 // pred_check_branch
      %229 = sbr.rel (%p226) target = $region12
    $region11: #{attention_block.1} parent=5 // pred_region
      %s230 = ssub.s32 %s15, 1
      // Predicated region
      $region13: #{attention_block.1} parent=11 // pred_check
        %p231 = pneg %p104
      $region14: #{attention_block.1} parent=11 // pred_check_branch
        %233 = sbr.rel (%p231) target = $region16
      $region15: #{attention_block.1} parent=11 // pred_region
        _
      $region16: #{attention_block.1} parent=11 // pred_fallthru
        _
      // Predicated region
      $region17: #{attention_block.1} parent=11 // pred_check
        %p234 = pneg %p125
      $region18: #{attention_block.1} parent=11 // pred_check_branch
        %236 = sbr.rel (%p234) target = $region20
      $region19: #{attention_block.1} parent=11 // pred_region
        _
      $region20: #{attention_block.1} parent=11 // pred_fallthru
        _
      // Predicated region
      $region21: #{attention_block.1} parent=11 // pred_check
        %p237 = pneg %p146
      $region22: #{attention_block.1} parent=11 // pred_check_branch
        %239 = sbr.rel (%p237) target = $region24
      $region23: #{attention_block.1} parent=11 // pred_region
        _
      $region24: #{attention_block.1} parent=11 // pred_fallthru
        _
      // Predicated region
      $region25: #{attention_block.1} parent=11 // pred_check
        %p240 = pneg %p167
      $region26: #{attention_block.1} parent=11 // pred_check_branch
        %242 = sbr.rel (%p240) target = $region28
      $region27: #{attention_block.1} parent=11 // pred_region
        _
      $region28: #{attention_block.1} parent=11 // pred_fallthru
        _
      // Predicated region
      $region29: #{attention_block.1} parent=11 // pred_check
        %p243 = pneg %p188
      $region30: #{attention_block.1} parent=11 // pred_check_branch
        %245 = sbr.rel (%p243) target = $region32
      $region31: #{attention_block.1} parent=11 // pred_region
        _
      $region32: #{attention_block.1} parent=11 // pred_fallthru
        _
    $region12: #{attention_block.1} parent=5 // pred_fallthru
      _
    %p246 = scmp.lt.s32.totalorder %s15, 2
    // Predicated region
    $region33: #{attention_block.1} parent=5 // pred_check
      %p247 = pneg %p246
    $region34: #{attention_block.1} parent=5 // pred_check_branch
      %249 = sbr.rel (%p247) target = $region36
    $region35: #{attention_block.1} parent=5 // pred_region
      // Predicated region
      $region37: #{attention_block.1} parent=35 // pred_check
        %p250 = pneg %p49
      $region38: #{attention_block.1} parent=35 // pred_check_branch
        %252 = sbr.rel (%p250) target = $region40
      $region39: #{attention_block.1} parent=35 // pred_region
        %s253 = smul.u32 2, %s23
        %p254 = scmp.lt.s32.totalorder %s22, 1
        %s255 = scalar_select %p254, %s22, 1
        %p256 = scmp.lt.s32.totalorder %s253, 1
        %s257 = scalar_select %p256, %s253, 1
        %s258 = smul.addr %s255, 2
        %s259 = sadd.s32 %s257, %s258
        %s260 = smul.addr %s259, 4
        %s261 = scalar_lea.vmem %s0, %s260
        %s262 = smul.u32 2, %s23
      $region40: #{attention_block.1} parent=35 // pred_fallthru
        _
      // Predicated region
      $region41: #{attention_block.1} parent=35 // pred_check
        %p263 = pneg %p77
      $region42: #{attention_block.1} parent=35 // pred_check_branch
        %265 = sbr.rel (%p263) target = $region44
      $region43: #{attention_block.1} parent=35 // pred_region
        %s266 = smul.u32 2, %s23
        %p267 = scmp.lt.s32.totalorder %s22, 1
        %s268 = scalar_select %p267, %s22, 1
        %p269 = scmp.lt.s32.totalorder %s266, 1
        %s270 = scalar_select %p269, %s266, 1
        %s271 = smul.addr %s268, 2
        %s272 = sadd.s32 %s270, %s271
        %s273 = smul.addr %s272, 4
        %s274 = scalar_lea.vmem %s1, %s273
        %s275 = smul.u32 2, %s23
      $region44: #{attention_block.1} parent=35 // pred_fallthru
        _
    $region36: #{attention_block.1} parent=5 // pred_fallthru
      _
    %p276 = scmp.le.s32.totalorder 1, %s15
    %p277 = scmp.lt.s32.totalorder %s15, 3
    %p278 = pnand %p276, %p277
    %p279 = pneg %p278
    // Predicated region
    $region45: #{attention_block.1} parent=5 // pred_check
      _
    $region46: #{attention_block.1} parent=5 // pred_check_branch
      %281 = sbr.rel (%p278) target = $region48
    $region47: #{attention_block.1} parent=5 // pred_region
      %s282 = ssub.s32 %s15, 1
      %s283 = smul.u32 2, %s25
      %p284 = scmp.lt.s32.totalorder %s24, 1
      %s285 = scalar_select %p284, %s24, 1
      %p286 = scmp.lt.s32.totalorder %s283, 1
      %s287 = scalar_select %p286, %s283, 1
      %s288 = smul.addr %s285, 2
      %s289 = sadd.s32 %s287, %s288
      %s290 = smul.addr %s289, 4
      %s291 = scalar_lea.vmem %s0, %s290
      %p292 = pneg %p55
      %p293 = pneg %p52
      %s294 = smul.u32 2, %s25
      %p295 = scmp.lt.s32.totalorder %s24, 1
      %s296 = scalar_select %p295, %s24, 1
      %p297 = scmp.lt.s32.totalorder %s294, 1
      %s298 = scalar_select %p297, %s294, 1
      %s299 = smul.addr %s296, 2
      %s300 = sadd.s32 %s298, %s299
      %s301 = smul.addr %s300, 4
      %s302 = scalar_lea.vmem %s1, %s301
      %p303 = pneg %p83
      %p304 = pneg %p80
      %p305 = pneg %p104
      %p306 = pneg %p101
      %p307 = pneg %p125
      %p308 = pneg %p122
      %p309 = pneg %p146
      %p310 = pneg %p143
      %p311 = pneg %p167
      %p312 = pneg %p164
      %p313 = pneg %p188
      %p314 = pneg %p185
      %p315 = pneg %p216
      %p316 = pneg %p213
      %s317 = smul.u32 2, %s25
      %p318 = scmp.lt.s32.totalorder %s24, 1
      %s319 = scalar_select %p318, %s24, 1
      %p320 = scmp.lt.s32.totalorder %s317, 1
      %s321 = scalar_select %p320, %s317, 1
      %s322 = smul.addr %s319, 2
      %s323 = sadd.s32 %s321, %s322
      %s324 = smul.addr %s323, 4
      %s325 = scalar_lea.vmem %s7, %s324
      %s326 = smul.u32 2, %s25
      %p327 = scmp.lt.s32.totalorder %s24, 1
      %s328 = scalar_select %p327, %s24, 1
      %p329 = scmp.lt.s32.totalorder %s326, 1
      %s330 = scalar_select %p329, %s326, 1
      %s331 = smul.addr %s328, 2
      %s332 = sadd.s32 %s330, %s331
      %s333 = smul.addr %s332, 4
      %s334 = scalar_lea.vmem %s0, %s333
      %s335 = smul.u32 2, %s25
      %s336 = smul.u32 2, %s25
      %p337 = scmp.lt.s32.totalorder %s24, 1
      %s338 = scalar_select %p337, %s24, 1
      %p339 = scmp.lt.s32.totalorder %s336, 1
      %s340 = scalar_select %p339, %s336, 1
      %s341 = smul.addr %s338, 2
      %s342 = sadd.s32 %s340, %s341
      %s343 = smul.addr %s342, 4
      %s344 = scalar_lea.vmem %s1, %s343
      %s345 = smul.u32 2, %s25
      %s346 = smul.u32 2, %s25
      %p347 = scmp.lt.s32.totalorder %s24, 1
      %s348 = scalar_select %p347, %s24, 1
      %p349 = scmp.lt.s32.totalorder %s346, 1
      %s350 = scalar_select %p349, %s346, 1
      %s351 = smul.addr %s348, 2
      %s352 = sadd.s32 %s350, %s351
      %s353 = smul.addr %s352, 4
      %s354 = scalar_lea.vmem %s7, %s353
      %s355 = smul.u32 2, %s25
      %v356 = vld [vmem:[%s334] sm:$0xff]
      %v357 = vld [vmem:[%s344] sm:$0xff]
      %v358 = vld [vmem:[%s2] sm:$0xff]
      %v359 = vld [vmem:[%s3] sm:$0xff]
      %v360 = vld [vmem:[%s4] sm:$0xff]
      %362 = vset.pattern.permute.xlu0 0
      %363 = vperm.xlu0 %362, %v360
      %v364 = vpop.permute.xlu0 %363
      %367 = vset.pattern.permute.xlu0 0
      %368 = vperm.xlu0 %367, %v358
      %v369 = vpop.permute.xlu0 %368
      %v372 = vlaneseq
      %v373 = vshrl.u32 %v372, 7
      %v374 = vsub.s32 0, %v373
      %v375 = vrot.slane %v356, %v374
      %v376 = vlaneseq
      %v377 = vshrl.u32 %v376, 7
      %v378 = vsub.s32 4, %v377
      %v379 = vrot.slane %v356, %v378
      %v382 = vlaneseq
      %v383 = vshrl.u32 %v382, 7
      %v384 = vsub.s32 0, %v383
      %v385 = vrot.slane %v375, %v384
      %v386 = vlaneseq
      %v387 = vshrl.u32 %v386, 7
      %v388 = vsub.s32 0, %v387
      %v389 = vrot.slane %v379, %v388
      %v390 = vmul.f32 %v369, %v385
      %v391 = vmul.f32 %v369, %v389
      %v392 = vadd.f32 %v364, %v390
      %v393 = vadd.f32 %v364, %v391
      %394 = vset.pattern.permute.xlu0 1
      %395 = vperm.xlu0 %394, %v358
      %v396 = vpop.permute.xlu0 %395
      %v398 = vlaneseq
      %v399 = vshrl.u32 %v398, 7
      %v400 = vsub.s32 1, %v399
      %v401 = vrot.slane %v356, %v400
      %v402 = vlaneseq
      %v403 = vshrl.u32 %v402, 7
      %v404 = vsub.s32 5, %v403
      %v405 = vrot.slane %v356, %v404
      %v408 = vlaneseq
      %v409 = vshrl.u32 %v408, 7
      %v410 = vsub.s32 1, %v409
      %v411 = vrot.slane %v401, %v410
      %v412 = vlaneseq
      %v413 = vshrl.u32 %v412, 7
      %v414 = vsub.s32 1, %v413
      %v415 = vrot.slane %v405, %v414
      %v416 = vmul.f32 %v396, %v411
      %v417 = vmul.f32 %v396, %v415
      %v418 = vadd.f32 %v392, %v416
      %v419 = vadd.f32 %v393, %v417
      %420 = vset.pattern.permute.xlu0 2
      %421 = vperm.xlu0 %420, %v358
      %v422 = vpop.permute.xlu0 %421
      %v424 = vlaneseq
      %v425 = vshrl.u32 %v424, 7
      %v426 = vsub.s32 2, %v425
      %v427 = vrot.slane %v356, %v426
      %v428 = vlaneseq
      %v429 = vshrl.u32 %v428, 7
      %v430 = vsub.s32 6, %v429
      %v431 = vrot.slane %v356, %v430
      %v434 = vlaneseq
      %v435 = vshrl.u32 %v434, 7
      %v436 = vsub.s32 2, %v435
      %v437 = vrot.slane %v427, %v436
      %v438 = vlaneseq
      %v439 = vshrl.u32 %v438, 7
      %v440 = vsub.s32 2, %v439
      %v441 = vrot.slane %v431, %v440
      %v442 = vmul.f32 %v422, %v437
      %v443 = vmul.f32 %v422, %v441
      %v444 = vadd.f32 %v418, %v442
      %v445 = vadd.f32 %v419, %v443
      %446 = vset.pattern.permute.xlu0 3
      %447 = vperm.xlu0 %446, %v358
      %v448 = vpop.permute.xlu0 %447
      %v450 = vlaneseq
      %v451 = vshrl.u32 %v450, 7
      %v452 = vsub.s32 3, %v451
      %v453 = vrot.slane %v356, %v452
      %v454 = vlaneseq
      %v455 = vshrl.u32 %v454, 7
      %v456 = vsub.s32 7, %v455
      %v457 = vrot.slane %v356, %v456
      %v460 = vlaneseq
      %v461 = vshrl.u32 %v460, 7
      %v462 = vsub.s32 3, %v461
      %v463 = vrot.slane %v453, %v462
      %v464 = vlaneseq
      %v465 = vshrl.u32 %v464, 7
      %v466 = vsub.s32 3, %v465
      %v467 = vrot.slane %v457, %v466
      %v468 = vmul.f32 %v448, %v463
      %v469 = vmul.f32 %v448, %v467
      %v470 = vadd.f32 %v444, %v468
      %v471 = vadd.f32 %v445, %v469
      %473 = vset.pattern.permute.xlu0 0
      %474 = vperm.xlu0 %473, %v359
      %v475 = vpop.permute.xlu0 %474
      %v478 = vlaneseq
      %v479 = vshrl.u32 %v478, 7
      %v480 = vsub.s32 0, %v479
      %v481 = vrot.slane %v357, %v480
      %v482 = vlaneseq
      %v483 = vshrl.u32 %v482, 7
      %v484 = vsub.s32 4, %v483
      %v485 = vrot.slane %v357, %v484
      %v488 = vlaneseq
      %v489 = vshrl.u32 %v488, 7
      %v490 = vsub.s32 0, %v489
      %v491 = vrot.slane %v481, %v490
      %v492 = vlaneseq
      %v493 = vshrl.u32 %v492, 7
      %v494 = vsub.s32 0, %v493
      %v495 = vrot.slane %v485, %v494
      %v496 = vmul.f32 %v475, %v491
      %v497 = vmul.f32 %v475, %v495
      %v498 = vadd.f32 %v470, %v496
      %v499 = vadd.f32 %v471, %v497
      %500 = vset.pattern.permute.xlu0 1
      %501 = vperm.xlu0 %500, %v359
      %v502 = vpop.permute.xlu0 %501
      %v504 = vlaneseq
      %v505 = vshrl.u32 %v504, 7
      %v506 = vsub.s32 1, %v505
      %v507 = vrot.slane %v357, %v506
      %v508 = vlaneseq
      %v509 = vshrl.u32 %v508, 7
      %v510 = vsub.s32 5, %v509
      %v511 = vrot.slane %v357, %v510
      %v514 = vlaneseq
      %v515 = vshrl.u32 %v514, 7
      %v516 = vsub.s32 1, %v515
      %v517 = vrot.slane %v507, %v516
      %v518 = vlaneseq
      %v519 = vshrl.u32 %v518, 7
      %v520 = vsub.s32 1, %v519
      %v521 = vrot.slane %v511, %v520
      %v522 = vmul.f32 %v502, %v517
      %v523 = vmul.f32 %v502, %v521
      %v524 = vadd.f32 %v498, %v522
      %v525 = vadd.f32 %v499, %v523
      %526 = vset.pattern.permute.xlu0 2
      %527 = vperm.xlu0 %526, %v359
      %v528 = vpop.permute.xlu0 %527
      %v530 = vlaneseq
      %v531 = vshrl.u32 %v530, 7
      %v532 = vsub.s32 2, %v531
      %v533 = vrot.slane %v357, %v532
      %v534 = vlaneseq
      %v535 = vshrl.u32 %v534, 7
      %v536 = vsub.s32 6, %v535
      %v537 = vrot.slane %v357, %v536
      %v540 = vlaneseq
      %v541 = vshrl.u32 %v540, 7
      %v542 = vsub.s32 2, %v541
      %v543 = vrot.slane %v533, %v542
      %v544 = vlaneseq
      %v545 = vshrl.u32 %v544, 7
      %v546 = vsub.s32 2, %v545
      %v547 = vrot.slane %v537, %v546
      %v548 = vmul.f32 %v528, %v543
      %v549 = vmul.f32 %v528, %v547
      %v550 = vadd.f32 %v524, %v548
      %v551 = vadd.f32 %v525, %v549
      %552 = vset.pattern.permute.xlu0 3
      %553 = vperm.xlu0 %552, %v359
      %v554 = vpop.permute.xlu0 %553
      %v556 = vlaneseq
      %v557 = vshrl.u32 %v556, 7
      %v558 = vsub.s32 3, %v557
      %v559 = vrot.slane %v357, %v558
      %v560 = vlaneseq
      %v561 = vshrl.u32 %v560, 7
      %v562 = vsub.s32 7, %v561
      %v563 = vrot.slane %v357, %v562
      %v566 = vlaneseq
      %v567 = vshrl.u32 %v566, 7
      %v568 = vsub.s32 3, %v567
      %v569 = vrot.slane %v559, %v568
      %v570 = vlaneseq
      %v571 = vshrl.u32 %v570, 7
      %v572 = vsub.s32 3, %v571
      %v573 = vrot.slane %v563, %v572
      %v574 = vmul.f32 %v554, %v569
      %v575 = vmul.f32 %v554, %v573
      %v576 = vadd.f32 %v550, %v574
      %v577 = vadd.f32 %v551, %v575
      %v578 = vmax.f32 %v576, 0.0
      %v579 = vmax.f32 %v577, 0.0
      %v580 = vld [vmem:[%s5] sm:$0xff]
      %582 = vset.pattern.permute.xlu0 0
      %583 = vperm.xlu0 %582, %v580
      %v584 = vpop.permute.xlu0 %583
      %v586 = vmul.f32 %v578, %v584
      %v587 = vmul.f32 %v579, %v584
      %v588 = vrot.slane %v586, 4
      %v589 = vadd.f32 %v586, %v588
      %v590 = vrot.slane %v589, 2
      %v591 = vadd.f32 %v589, %v590
      %v592 = vrot.slane %v591, 1
      %v593 = vadd.f32 %v591, %v592
      %v594 = vrot.slane %v587, 4
      %v595 = vadd.f32 %v587, %v594
      %v596 = vrot.slane %v595, 2
      %v597 = vadd.f32 %v595, %v596
      %v598 = vrot.slane %v597, 1
      %v599 = vadd.f32 %v597, %v598
      %v600 = vld [vmem:[#allocation2] sm:$0x1]
      %602 = vset.pattern.permute.xlu0 0
      %603 = vperm.xlu0 %602, %v600
      %v604 = vpop.permute.xlu0 %603
      %v606 = vlaneseq
      %v607 = vshrl.u32 %v606, 7
      %v608 = vsub.s32 0, %v607
      %v609 = vrot.slane %v604, %v608
      %v610 = vadd.f32 %v593, %v609
      %v611 = vadd.f32 %v599, %v609
      %v612 = vxor.u32 %v610, 2147483648
      %v613 = vxor.u32 %v611, 2147483648
      %v614 = vmul.f32 %v612, 1.442695
      %v615 = vpow.pop %v614
      %v616 = vmul.f32 %v613, 1.442695
      %v617 = vpow.pop %v616
      %v618 = vadd.f32 %v615, 1.0
      %v619 = vadd.f32 %v617, 1.0
      %v620 = vrcp.pop %v618
      %v621 = vmul.f32 1.0, %v620
      %v622 = vrcp.pop %v619
      %v623 = vmul.f32 1.0, %v622
      %v626 = vcombine.low %v621, %v623
      %v628 = vmul.f32 %v357, %v626
      %629 = vst [vmem:[%s354] sm:$0xff] %v628
      %s630 = smul.u32 2, %s25
      %p631 = scmp.lt.s32.totalorder %s24, 1
      %s632 = scalar_select %p631, %s24, 1
      %p633 = scmp.lt.s32.totalorder %s630, 1
      %s634 = scalar_select %p633, %s630, 1
      %s635 = smul.addr %s632, 2
      %s636 = sadd.s32 %s634, %s635
      %s637 = smul.addr %s636, 4
      %s638 = scalar_lea.vmem %s7, %s637
      // Predicated region
      $region49: #{attention_block.1} parent=47 // pred_check
        %p639 = pneg %p213
      $region50: #{attention_block.1} parent=47 // pred_check_branch
        %641 = sbr.rel (%p639) target = $region52
      $region51: #{attention_block.1} parent=47 // pred_region
        %s642 = smul.u32 2, %s25
      $region52: #{attention_block.1} parent=47 // pred_fallthru
        _
    $region48: #{attention_block.1} parent=5 // pred_fallthru
      _
    %p643 = scmp.le.s32.totalorder 2, %s15
    // Predicated region
    $region53: #{attention_block.1} parent=5 // pred_check
      %p644 = pneg %p643
    $region54: #{attention_block.1} parent=5 // pred_check_branch
      %646 = sbr.rel (%p644) target = $region56
    $region55: #{attention_block.1} parent=5 // pred_region
      %s647 = ssub.s32 %s15, 2
      // Predicated region
      $region57: #{attention_block.1} parent=55 // pred_check
        %p648 = pneg %p219
      $region58: #{attention_block.1} parent=55 // pred_check_branch
        %650 = sbr.rel (%p648) target = $region60
      $region59: #{attention_block.1} parent=55 // pred_region
        %s651 = smul.u32 2, %s27
        %p652 = scmp.lt.s32.totalorder %s26, 1
        %s653 = scalar_select %p652, %s26, 1
        %p654 = scmp.lt.s32.totalorder %s651, 1
        %s655 = scalar_select %p654, %s651, 1
        %s656 = smul.addr %s653, 2
        %s657 = sadd.s32 %s655, %s656
        %s658 = smul.addr %s657, 4
        %s659 = scalar_lea.vmem %s7, %s658
      $region60: #{attention_block.1} parent=55 // pred_fallthru
        _
    $region56: #{attention_block.1} parent=5 // pred_fallthru
      _
  $region6: #{attention_block.1} parent=0 // loop_footer
    %s19 = sadd.s32 1, %s15
  $region7: #{attention_block.1} parent=0 // loop_footer_branch
    %14 = sbr.rel target = $region3
  $region8: #{attention_block.1} parent=0 // loop_exit
    _

</llo_original>
